<compile_context>
chip_gen: v7x
topology: tpu7x:2x2x1
jax: 0.10.0
libtpu: 0.0.40
codegen_flags: <defaults>
</compile_context>

<pallas_src>
import functools

import jax
import jax.numpy as jnp
from jax.experimental import pallas as pl
from jax.experimental.pallas import tpu as pltpu


def _round_up(n, m):
    return ((n + m - 1) // m) * m


def mlp_kernel(x_ref, p_ref, o_ref, *, F, H, H_pad, O_pad):
    """Lane-major 2-layer MLP.

    x_ref : (F_pad, B_pad)  -- batch on lanes, zero-padded
    p_ref : (H_pad + O_pad, 128) packed params:
              rows [0:H_pad]        cols [0:F]  -> w1 (H, F), col F -> b1
              rows [H_pad:H_pad+O_pad] cols [0:H] -> w2 (O, H), col H -> b2
    o_ref : (O_pad, B_pad)  -- lane-dense padded output
    """
    B_pad = x_ref.shape[1]

    x = x_ref[...]                                     # (F_pad, B_pad)
    p = p_ref[...]                                     # (H_pad+O_pad, 128), ~3 vregs

    w1 = p[0:H_pad, 0:F]                               # (H_pad, F)   zero-padded rows
    b1 = p[0:H_pad, F:F + 1]                           # (H_pad, 1)
    w2 = p[H_pad:H_pad + O_pad, 0:H]                   # (O_pad, H)   zero-padded rows
    b2 = p[H_pad:H_pad + O_pad, H:H + 1]               # (O_pad, 1)

    # ---- Layer 1: relu(W1 @ x + b1) as F rank-1 broadcast-MACs on the VPU.
    # Bias is the accumulator init (one hoisted broadcast, no separate add).
    h = jnp.broadcast_to(b1, (H_pad, B_pad))
    for f in range(F):                                 # F is tiny & static -> unrolled
        h = h + w1[:, f:f + 1] * x[f:f + 1, :]
    h = jnp.maximum(h, 0.0)                            # (H_pad, B_pad)

    # ---- Layer 2: W2 @ h + b2 as H broadcast-MACs (no activation, matches `predict`).
    out = jnp.broadcast_to(b2, (O_pad, B_pad))
    for i in range(H):                                 # H is tiny & static -> unrolled
        out = out + w2[:, i:i + 1] * h[i:i + 1, :]

    # Fully lane-dense store: (O_pad, B_pad) with B_pad a multiple of 128.
    o_ref[...] = out.astype(o_ref.dtype)


def prepare_params(w1, b1, w2, b2):
    """One-time parameter prep (hoisted out of the per-call path).

    PyTorch Linear stores W as (out_features, in_features); that layout is exactly
    what the lane-major kernel wants, so no transpose is needed. All four arrays are
    packed into a single (H_pad + O_pad, 128) f32 slab so the kernel does one param DMA.
    """
    w1 = jnp.asarray(w1, jnp.float32)                  # (H, F)
    b1 = jnp.asarray(b1, jnp.float32)                  # (H,)
    w2 = jnp.asarray(w2, jnp.float32)                  # (O, H)
    b2 = jnp.asarray(b2, jnp.float32)                  # (O,)

    H, F = w1.shape
    O = w2.shape[0]
    H_pad = _round_up(H, 8)
    O_pad = _round_up(O, 8)
    assert F + 1 <= 128 and H + 1 <= 128, "packed-slab layout assumes tiny F/H"

    slab = jnp.zeros((H_pad + O_pad, 128), jnp.float32)
    slab = slab.at[:H, :F].set(w1)
    slab = slab.at[:H, F].set(b1)
    slab = slab.at[H_pad:H_pad + O, :H].set(w2)
    slab = slab.at[H_pad:H_pad + O, H].set(b2)

    dims = (F, H, O, H_pad, O_pad)
    return slab, dims


@functools.partial(jax.jit, static_argnums=(2,))
def net_forward(x, param_slab, dims):
    """x: (B, F) f32. `param_slab`/`dims` come from `prepare_params`."""
    F, H, O, H_pad, O_pad = dims
    B = x.shape[0]
    assert x.shape[1] == F

    F_pad = _round_up(F, 8)
    B_pad = _round_up(max(B, 128), 128)                # 200 -> 256: lane-dense slab

    # Lane-major, zero-padded input slab: contiguous ~1 KiB rows for the HBM->VMEM DMA.
    x_t = jnp.zeros((F_pad, B_pad), jnp.float32).at[:F, :B].set(x.T)

    itemsize = 4  # f32
    cost = pl.CostEstimate(
        flops=2 * B_pad * (F * H_pad + H * O_pad),
        transcendentals=0,
        bytes_accessed=itemsize * (x_t.size + param_slab.size + O_pad * B_pad),
    )

    vmem = pl.BlockSpec(memory_space=pltpu.MemorySpace.VMEM)
    out_pad = pl.pallas_call(
        functools.partial(mlp_kernel, F=F, H=H, H_pad=H_pad, O_pad=O_pad),
        out_shape=jax.ShapeDtypeStruct((O_pad, B_pad), jnp.float32),
        in_specs=[vmem, vmem],
        out_specs=vmem,
        cost_estimate=cost,
    )(x_t, param_slab)

    # Back to the module's natural (B, O) shape (tiny: <= 8 KB).
    return out_pad[:O, :B].T


def init_linear_params(key, in_features, out_features):
    """Deterministic init mimicking torch.nn.Linear default: U(-1/sqrt(fan_in), 1/sqrt(fan_in))."""
    kw, kb = jax.random.split(key)
    bound = 1.0 / jnp.sqrt(jnp.float32(in_features))
    w = jax.random.uniform(kw, (out_features, in_features), jnp.float32, -bound, bound)
    b = jax.random.uniform(kb, (out_features,), jnp.float32, -bound, bound)
    return w, b


if __name__ == "__main__":
    # Shapes implied by the script: x = cat of two (100, 2) normal clouds -> (200, 2),
    # Net(n_features=2, n_hidden=10, n_output=2).
    n_features, n_hidden, n_output = 2, 10, 2
    batch = 200

    key = jax.random.PRNGKey(0)
    k_data, k_l1, k_l2 = jax.random.split(key, 3)

    # Deterministic synthetic data: two gaussian clouds centered at +2 and -2 (like the script).
    k0, k1 = jax.random.split(k_data)
    x0 = 2.0 + jax.random.normal(k0, (batch // 2, n_features), jnp.float32)
    x1 = -2.0 + jax.random.normal(k1, (batch // 2, n_features), jnp.float32)
    x = jnp.concatenate([x0, x1], axis=0).astype(jnp.float32)  # (200, 2)

    w1, b1 = init_linear_params(k_l1, n_features, n_hidden)
    w2, b2 = init_linear_params(k_l2, n_hidden, n_output)

    # One-time param prep (packing / padding hoisted out of the per-call path).
    param_slab, dims = prepare_params(w1, b1, w2, b2)

    out = net_forward(x, param_slab, dims)
    out = jax.block_until_ready(out)

    # Pure-JAX reference check of the same forward pass.
    ref = jnp.maximum(x @ w1.T + b1, 0.0) @ w2.T + b2
    assert out.shape == (batch, n_output)
    assert jnp.allclose(out, ref, atol=1e-5, rtol=1e-5)

    print("KERNEL_OK")
</pallas_src>

<mosaic_0001>
module attributes {stable_mosaic.version = 11 : i64} {
  func.func @mlp_kernel(%arg0: memref<8x256xf32, #tpu.memory_space<vmem>>, %arg1: memref<24x128xf32, #tpu.memory_space<vmem>>, %arg2: memref<8x256xf32, #tpu.memory_space<vmem>>) attributes {dimension_semantics = [], scalar_prefetch = 0 : i64, scratch_operands = 0 : i64, tpu.core_type = #tpu.core_type<tc>} {
    %c0 = arith.constant 0 : index
    %c0_0 = arith.constant 0 : index
    %0 = vector.load %arg0[%c0, %c0_0] : memref<8x256xf32, #tpu.memory_space<vmem>>, vector<8x256xf32>
    %c0_1 = arith.constant 0 : index
    %c0_2 = arith.constant 0 : index
    %1 = vector.load %arg1[%c0_1, %c0_2] : memref<24x128xf32, #tpu.memory_space<vmem>>, vector<24x128xf32>
    %2 = vector.extract_strided_slice %1 {offsets = [0, 0], sizes = [16, 2], strides = [1, 1]} : vector<24x128xf32> to vector<16x2xf32>
    %3 = vector.extract_strided_slice %1 {offsets = [0, 2], sizes = [16, 1], strides = [1, 1]} : vector<24x128xf32> to vector<16x1xf32>
    %4 = vector.extract_strided_slice %1 {offsets = [16, 0], sizes = [8, 10], strides = [1, 1]} : vector<24x128xf32> to vector<8x10xf32>
    %5 = vector.extract_strided_slice %1 {offsets = [16, 10], sizes = [8, 1], strides = [1, 1]} : vector<24x128xf32> to vector<8x1xf32>
    %6 = vector.shape_cast %3 : vector<16x1xf32> to vector<16x1xf32>
    %7 = vector.broadcast %6 : vector<16x1xf32> to vector<16x256xf32>
    %8 = vector.extract_strided_slice %2 {offsets = [0, 0], sizes = [16, 1], strides = [1, 1]} : vector<16x2xf32> to vector<16x1xf32>
    %9 = vector.extract_strided_slice %0 {offsets = [0, 0], sizes = [1, 256], strides = [1, 1]} : vector<8x256xf32> to vector<1x256xf32>
    %10 = vector.broadcast %8 : vector<16x1xf32> to vector<16x256xf32>
    %11 = vector.broadcast %9 : vector<1x256xf32> to vector<16x256xf32>
    %12 = arith.mulf %10, %11 : vector<16x256xf32>
    %13 = arith.addf %7, %12 : vector<16x256xf32>
    %14 = vector.extract_strided_slice %2 {offsets = [0, 1], sizes = [16, 1], strides = [1, 1]} : vector<16x2xf32> to vector<16x1xf32>
    %15 = vector.extract_strided_slice %0 {offsets = [1, 0], sizes = [1, 256], strides = [1, 1]} : vector<8x256xf32> to vector<1x256xf32>
    %16 = vector.broadcast %14 : vector<16x1xf32> to vector<16x256xf32>
    %17 = vector.broadcast %15 : vector<1x256xf32> to vector<16x256xf32>
    %18 = arith.mulf %16, %17 : vector<16x256xf32>
    %19 = arith.addf %13, %18 : vector<16x256xf32>
    %cst = arith.constant 0.000000e+00 : f32
    %20 = vector.broadcast %cst : f32 to vector<16x256xf32>
    %21 = arith.maximumf %19, %20 : vector<16x256xf32>
    %22 = vector.shape_cast %5 : vector<8x1xf32> to vector<8x1xf32>
    %23 = vector.broadcast %22 : vector<8x1xf32> to vector<8x256xf32>
    %24 = vector.extract_strided_slice %4 {offsets = [0, 0], sizes = [8, 1], strides = [1, 1]} : vector<8x10xf32> to vector<8x1xf32>
    %25 = vector.extract_strided_slice %21 {offsets = [0, 0], sizes = [1, 256], strides = [1, 1]} : vector<16x256xf32> to vector<1x256xf32>
    %26 = vector.broadcast %24 : vector<8x1xf32> to vector<8x256xf32>
    %27 = vector.broadcast %25 : vector<1x256xf32> to vector<8x256xf32>
    %28 = arith.mulf %26, %27 : vector<8x256xf32>
    %29 = arith.addf %23, %28 : vector<8x256xf32>
    %30 = vector.extract_strided_slice %4 {offsets = [0, 1], sizes = [8, 1], strides = [1, 1]} : vector<8x10xf32> to vector<8x1xf32>
    %31 = vector.extract_strided_slice %21 {offsets = [1, 0], sizes = [1, 256], strides = [1, 1]} : vector<16x256xf32> to vector<1x256xf32>
    %32 = vector.broadcast %30 : vector<8x1xf32> to vector<8x256xf32>
    %33 = vector.broadcast %31 : vector<1x256xf32> to vector<8x256xf32>
    %34 = arith.mulf %32, %33 : vector<8x256xf32>
    %35 = arith.addf %29, %34 : vector<8x256xf32>
    %36 = vector.extract_strided_slice %4 {offsets = [0, 2], sizes = [8, 1], strides = [1, 1]} : vector<8x10xf32> to vector<8x1xf32>
    %37 = vector.extract_strided_slice %21 {offsets = [2, 0], sizes = [1, 256], strides = [1, 1]} : vector<16x256xf32> to vector<1x256xf32>
    %38 = vector.broadcast %36 : vector<8x1xf32> to vector<8x256xf32>
    %39 = vector.broadcast %37 : vector<1x256xf32> to vector<8x256xf32>
    %40 = arith.mulf %38, %39 : vector<8x256xf32>
    %41 = arith.addf %35, %40 : vector<8x256xf32>
    %42 = vector.extract_strided_slice %4 {offsets = [0, 3], sizes = [8, 1], strides = [1, 1]} : vector<8x10xf32> to vector<8x1xf32>
    %43 = vector.extract_strided_slice %21 {offsets = [3, 0], sizes = [1, 256], strides = [1, 1]} : vector<16x256xf32> to vector<1x256xf32>
    %44 = vector.broadcast %42 : vector<8x1xf32> to vector<8x256xf32>
    %45 = vector.broadcast %43 : vector<1x256xf32> to vector<8x256xf32>
    %46 = arith.mulf %44, %45 : vector<8x256xf32>
    %47 = arith.addf %41, %46 : vector<8x256xf32>
    %48 = vector.extract_strided_slice %4 {offsets = [0, 4], sizes = [8, 1], strides = [1, 1]} : vector<8x10xf32> to vector<8x1xf32>
    %49 = vector.extract_strided_slice %21 {offsets = [4, 0], sizes = [1, 256], strides = [1, 1]} : vector<16x256xf32> to vector<1x256xf32>
    %50 = vector.broadcast %48 : vector<8x1xf32> to vector<8x256xf32>
    %51 = vector.broadcast %49 : vector<1x256xf32> to vector<8x256xf32>
    %52 = arith.mulf %50, %51 : vector<8x256xf32>
    %53 = arith.addf %47, %52 : vector<8x256xf32>
    %54 = vector.extract_strided_slice %4 {offsets = [0, 5], sizes = [8, 1], strides = [1, 1]} : vector<8x10xf32> to vector<8x1xf32>
    %55 = vector.extract_strided_slice %21 {offsets = [5, 0], sizes = [1, 256], strides = [1, 1]} : vector<16x256xf32> to vector<1x256xf32>
    %56 = vector.broadcast %54 : vector<8x1xf32> to vector<8x256xf32>
    %57 = vector.broadcast %55 : vector<1x256xf32> to vector<8x256xf32>
    %58 = arith.mulf %56, %57 : vector<8x256xf32>
    %59 = arith.addf %53, %58 : vector<8x256xf32>
    %60 = vector.extract_strided_slice %4 {offsets = [0, 6], sizes = [8, 1], strides = [1, 1]} : vector<8x10xf32> to vector<8x1xf32>
    %61 = vector.extract_strided_slice %21 {offsets = [6, 0], sizes = [1, 256], strides = [1, 1]} : vector<16x256xf32> to vector<1x256xf32>
    %62 = vector.broadcast %60 : vector<8x1xf32> to vector<8x256xf32>
    %63 = vector.broadcast %61 : vector<1x256xf32> to vector<8x256xf32>
    %64 = arith.mulf %62, %63 : vector<8x256xf32>
    %65 = arith.addf %59, %64 : vector<8x256xf32>
    %66 = vector.extract_strided_slice %4 {offsets = [0, 7], sizes = [8, 1], strides = [1, 1]} : vector<8x10xf32> to vector<8x1xf32>
    %67 = vector.extract_strided_slice %21 {offsets = [7, 0], sizes = [1, 256], strides = [1, 1]} : vector<16x256xf32> to vector<1x256xf32>
    %68 = vector.broadcast %66 : vector<8x1xf32> to vector<8x256xf32>
    %69 = vector.broadcast %67 : vector<1x256xf32> to vector<8x256xf32>
    %70 = arith.mulf %68, %69 : vector<8x256xf32>
    %71 = arith.addf %65, %70 : vector<8x256xf32>
    %72 = vector.extract_strided_slice %4 {offsets = [0, 8], sizes = [8, 1], strides = [1, 1]} : vector<8x10xf32> to vector<8x1xf32>
    %73 = vector.extract_strided_slice %21 {offsets = [8, 0], sizes = [1, 256], strides = [1, 1]} : vector<16x256xf32> to vector<1x256xf32>
    %74 = vector.broadcast %72 : vector<8x1xf32> to vector<8x256xf32>
    %75 = vector.broadcast %73 : vector<1x256xf32> to vector<8x256xf32>
    %76 = arith.mulf %74, %75 : vector<8x256xf32>
    %77 = arith.addf %71, %76 : vector<8x256xf32>
    %78 = vector.extract_strided_slice %4 {offsets = [0, 9], sizes = [8, 1], strides = [1, 1]} : vector<8x10xf32> to vector<8x1xf32>
    %79 = vector.extract_strided_slice %21 {offsets = [9, 0], sizes = [1, 256], strides = [1, 1]} : vector<16x256xf32> to vector<1x256xf32>
    %80 = vector.broadcast %78 : vector<8x1xf32> to vector<8x256xf32>
    %81 = vector.broadcast %79 : vector<1x256xf32> to vector<8x256xf32>
    %82 = arith.mulf %80, %81 : vector<8x256xf32>
    %83 = arith.addf %77, %82 : vector<8x256xf32>
    %c0_3 = arith.constant 0 : index
    %c0_4 = arith.constant 0 : index
    %84 = vector.load %arg2[%c0_3, %c0_4] : memref<8x256xf32, #tpu.memory_space<vmem>>, vector<8x256xf32>
    tpu.vector_store %arg2[%c0_3, %c0_4], %83 {strides = array<i32>} : memref<8x256xf32, #tpu.memory_space<vmem>>, vector<8x256xf32>,
    return
  }
}

</mosaic_0001>

<llo_original>
// kernel: net_forward.1
$region0: #{net_forward.1}
  #allocation0 [shape = 'u32[]', space=smem, size = 0x4, offset = 0x4, fixed_abs, tag = 'smem constant byte address 0x4 - core index']
  #allocation1 [shape = 'u32[144,128]{1,0:T(1,128)}', space=vmem, size = 0x12000, scoped, tag = 'internal scratch']
  %s0 = inlined_call_operand.vmem [shape: f32[8,256], index: 0, kind: input, shape index: {}]
  %s1 = inlined_call_operand.vmem [shape: f32[24,128], index: 1, kind: input, shape index: {}]
  %s2 = inlined_call_operand.vmem [shape: f32[8,256], index: 2, kind: output, shape index: {}]
  %s3 = sld [smem:[#allocation0]]
  $region18: #{net_forward.1} parent=0
    _
  %s5 = ssub.s32 1, %s3
  %s6 = scalar_select 0, %s5, %s3
  // Predicated region
  $region2: #{net_forward.1} parent=0 // pred_check
    _
  $region3: #{net_forward.1} parent=0 // pred_check_branch
    %8 = sbr.rel (0) target = $region5
  $region4: #{net_forward.1} parent=0 // pred_region
    _
  $region5: #{net_forward.1} parent=0 // pred_fallthru
    _
  // Predicated region
  $region6: #{net_forward.1} parent=0 // pred_check
    _
  $region7: #{net_forward.1} parent=0 // pred_check_branch
    %10 = sbr.rel (0) target = $region9
  $region8: #{net_forward.1} parent=0 // pred_region
    _
  $region9: #{net_forward.1} parent=0 // pred_fallthru
    _
  %v11 = vld [vmem:[%s0] sm:$0xff]
  %v12 = vld [vmem:[%s0 + $0x8] sm:$0xff]
  %v13 = vld [vmem:[%s1] sm:$0xff]
  %v14 = vld [vmem:[%s1 + $0x8] sm:$0xff]
  %v15 = vld [vmem:[%s1 + $0x10] sm:$0xff]
  %17 = vset.pattern.permute.xlu0 2
  %18 = vperm.xlu0 %17, %v13
  %v19 = vpop.permute.xlu0 %18
  %22 = vset.pattern.permute.xlu0 2
  %23 = vperm.xlu0 %22, %v14
  %v24 = vpop.permute.xlu0 %23
  %26 = vset.pattern.permute.xlu0 0
  %27 = vperm.xlu0 %26, %v13
  %v28 = vpop.permute.xlu0 %27
  %30 = vset.pattern.permute.xlu0 0
  %31 = vperm.xlu0 %30, %v14
  %v32 = vpop.permute.xlu0 %31
  %v34 = vlaneseq
  %v35 = vshrl.u32 %v34, 7
  %v36 = vsub.s32 0, %v35
  %v37 = vrot.slane %v11, %v36
  %v38 = vlaneseq
  %v39 = vshrl.u32 %v38, 7
  %v40 = vsub.s32 0, %v39
  %v41 = vrot.slane %v12, %v40
  %v42 = vmul.f32 %v28, %v37
  %v43 = vmul.f32 %v28, %v41
  %v44 = vmul.f32 %v32, %v37
  %v45 = vmul.f32 %v32, %v41
  %v46 = vadd.f32 %v19, %v42
  %v47 = vadd.f32 %v19, %v43
  %v48 = vadd.f32 %v24, %v44
  %v49 = vadd.f32 %v24, %v45
  %50 = vset.pattern.permute.xlu0 1
  %51 = vperm.xlu0 %50, %v13
  %v52 = vpop.permute.xlu0 %51
  %54 = vset.pattern.permute.xlu0 1
  %55 = vperm.xlu0 %54, %v14
  %v56 = vpop.permute.xlu0 %55
  %v58 = vlaneseq
  %v59 = vshrl.u32 %v58, 7
  %v60 = vsub.s32 1, %v59
  %v61 = vrot.slane %v11, %v60
  %v62 = vlaneseq
  %v63 = vshrl.u32 %v62, 7
  %v64 = vsub.s32 1, %v63
  %v65 = vrot.slane %v12, %v64
  %v66 = vmul.f32 %v52, %v61
  %v67 = vmul.f32 %v52, %v65
  %v68 = vmul.f32 %v56, %v61
  %v69 = vmul.f32 %v56, %v65
  %v70 = vadd.f32 %v46, %v66
  %v71 = vadd.f32 %v47, %v67
  %v72 = vadd.f32 %v48, %v68
  %v73 = vadd.f32 %v49, %v69
  %v74 = vmax.f32 %v70, 0.0
  %v75 = vmax.f32 %v71, 0.0
  %v76 = vmax.f32 %v72, 0.0
  %v77 = vmax.f32 %v73, 0.0
  %79 = vset.pattern.permute.xlu0 10
  %80 = vperm.xlu0 %79, %v15
  %v81 = vpop.permute.xlu0 %80
  %83 = vset.pattern.permute.xlu0 0
  %84 = vperm.xlu0 %83, %v15
  %v85 = vpop.permute.xlu0 %84
  %v87 = vlaneseq
  %v88 = vshrl.u32 %v87, 7
  %v89 = vsub.s32 0, %v88
  %v90 = vrot.slane %v74, %v89
  %v91 = vlaneseq
  %v92 = vshrl.u32 %v91, 7
  %v93 = vsub.s32 0, %v92
  %v94 = vrot.slane %v75, %v93
  %v95 = vmul.f32 %v85, %v90
  %v96 = vmul.f32 %v85, %v94
  %v97 = vadd.f32 %v81, %v95
  %v98 = vadd.f32 %v81, %v96
  %99 = vset.pattern.permute.xlu0 1
  %100 = vperm.xlu0 %99, %v15
  %v101 = vpop.permute.xlu0 %100
  %v103 = vlaneseq
  %v104 = vshrl.u32 %v103, 7
  %v105 = vsub.s32 1, %v104
  %v106 = vrot.slane %v74, %v105
  %v107 = vlaneseq
  %v108 = vshrl.u32 %v107, 7
  %v109 = vsub.s32 1, %v108
  %v110 = vrot.slane %v75, %v109
  %v111 = vmul.f32 %v101, %v106
  %v112 = vmul.f32 %v101, %v110
  %v113 = vadd.f32 %v97, %v111
  %v114 = vadd.f32 %v98, %v112
  %115 = vset.pattern.permute.xlu0 2
  %116 = vperm.xlu0 %115, %v15
  %v117 = vpop.permute.xlu0 %116
  %v119 = vlaneseq
  %v120 = vshrl.u32 %v119, 7
  %v121 = vsub.s32 2, %v120
  %v122 = vrot.slane %v74, %v121
  %v123 = vlaneseq
  %v124 = vshrl.u32 %v123, 7
  %v125 = vsub.s32 2, %v124
  %v126 = vrot.slane %v75, %v125
  %v127 = vmul.f32 %v117, %v122
  %v128 = vmul.f32 %v117, %v126
  %v129 = vadd.f32 %v113, %v127
  %v130 = vadd.f32 %v114, %v128
  %131 = vset.pattern.permute.xlu0 3
  %132 = vperm.xlu0 %131, %v15
  %v133 = vpop.permute.xlu0 %132
  %v135 = vlaneseq
  %v136 = vshrl.u32 %v135, 7
  %v137 = vsub.s32 3, %v136
  %v138 = vrot.slane %v74, %v137
  %v139 = vlaneseq
  %v140 = vshrl.u32 %v139, 7
  %v141 = vsub.s32 3, %v140
  %v142 = vrot.slane %v75, %v141
  %v143 = vmul.f32 %v133, %v138
  %v144 = vmul.f32 %v133, %v142
  %v145 = vadd.f32 %v129, %v143
  %v146 = vadd.f32 %v130, %v144
  %147 = vset.pattern.permute.xlu0 4
  %148 = vperm.xlu0 %147, %v15
  %v149 = vpop.permute.xlu0 %148
  %v151 = vlaneseq
  %v152 = vshrl.u32 %v151, 7
  %v153 = vsub.s32 4, %v152
  %v154 = vrot.slane %v74, %v153
  %v155 = vlaneseq
  %v156 = vshrl.u32 %v155, 7
  %v157 = vsub.s32 4, %v156
  %v158 = vrot.slane %v75, %v157
  %v159 = vmul.f32 %v149, %v154
  %v160 = vmul.f32 %v149, %v158
  %v161 = vadd.f32 %v145, %v159
  %v162 = vadd.f32 %v146, %v160
  %163 = vset.pattern.permute.xlu0 5
  %164 = vperm.xlu0 %163, %v15
  %v165 = vpop.permute.xlu0 %164
  %v167 = vlaneseq
  %v168 = vshrl.u32 %v167, 7
  %v169 = vsub.s32 5, %v168
  %v170 = vrot.slane %v74, %v169
  %v171 = vlaneseq
  %v172 = vshrl.u32 %v171, 7
  %v173 = vsub.s32 5, %v172
  %v174 = vrot.slane %v75, %v173
  %v175 = vmul.f32 %v165, %v170
  %v176 = vmul.f32 %v165, %v174
  %v177 = vadd.f32 %v161, %v175
  %v178 = vadd.f32 %v162, %v176
  %179 = vset.pattern.permute.xlu0 6
  %180 = vperm.xlu0 %179, %v15
  %v181 = vpop.permute.xlu0 %180
  %v183 = vlaneseq
  %v184 = vshrl.u32 %v183, 7
  %v185 = vsub.s32 6, %v184
  %v186 = vrot.slane %v74, %v185
  %v187 = vlaneseq
  %v188 = vshrl.u32 %v187, 7
  %v189 = vsub.s32 6, %v188
  %v190 = vrot.slane %v75, %v189
  %v191 = vmul.f32 %v181, %v186
  %v192 = vmul.f32 %v181, %v190
  %v193 = vadd.f32 %v177, %v191
  %v194 = vadd.f32 %v178, %v192
  %195 = vset.pattern.permute.xlu0 7
  %196 = vperm.xlu0 %195, %v15
  %v197 = vpop.permute.xlu0 %196
  %v199 = vlaneseq
  %v200 = vshrl.u32 %v199, 7
  %v201 = vsub.s32 7, %v200
  %v202 = vrot.slane %v74, %v201
  %v203 = vlaneseq
  %v204 = vshrl.u32 %v203, 7
  %v205 = vsub.s32 7, %v204
  %v206 = vrot.slane %v75, %v205
  %v207 = vmul.f32 %v197, %v202
  %v208 = vmul.f32 %v197, %v206
  %v209 = vadd.f32 %v193, %v207
  %v210 = vadd.f32 %v194, %v208
  %211 = vset.pattern.permute.xlu0 8
  %212 = vperm.xlu0 %211, %v15
  %v213 = vpop.permute.xlu0 %212
  %v215 = vlaneseq
  %v216 = vshrl.u32 %v215, 7
  %v217 = vsub.s32 0, %v216
  %v218 = vrot.slane %v76, %v217
  %v219 = vlaneseq
  %v220 = vshrl.u32 %v219, 7
  %v221 = vsub.s32 0, %v220
  %v222 = vrot.slane %v77, %v221
  %v223 = vmul.f32 %v213, %v218
  %v224 = vmul.f32 %v213, %v222
  %v225 = vadd.f32 %v209, %v223
  %v226 = vadd.f32 %v210, %v224
  %227 = vset.pattern.permute.xlu0 9
  %228 = vperm.xlu0 %227, %v15
  %v229 = vpop.permute.xlu0 %228
  %v231 = vlaneseq
  %v232 = vshrl.u32 %v231, 7
  %v233 = vsub.s32 1, %v232
  %v234 = vrot.slane %v76, %v233
  %v235 = vlaneseq
  %v236 = vshrl.u32 %v235, 7
  %v237 = vsub.s32 1, %v236
  %v238 = vrot.slane %v77, %v237
  %v239 = vmul.f32 %v229, %v234
  %v240 = vmul.f32 %v229, %v238
  %v241 = vadd.f32 %v225, %v239
  %v242 = vadd.f32 %v226, %v240
  %243 = vst [vmem:[%s2] sm:$0xff] %v241
  %244 = vst [vmem:[%s2 + $0x8] sm:$0xff] %v242
  // Predicated region
  $region10: #{net_forward.1} parent=0 // pred_check
    _
  $region11: #{net_forward.1} parent=0 // pred_check_branch
    %246 = sbr.rel (0) target = $region13
  $region12: #{net_forward.1} parent=0 // pred_region
    _
  $region13: #{net_forward.1} parent=0 // pred_fallthru
    _
  // Predicated region
  $region14: #{net_forward.1} parent=0 // pred_check
    _
  $region15: #{net_forward.1} parent=0 // pred_check_branch
    %248 = sbr.rel (0) target = $region17
  $region16: #{net_forward.1} parent=0 // pred_region
    _
  $region17: #{net_forward.1} parent=0 // pred_fallthru
    _

</llo_original>
